<compile_context>
chip_gen: v5e
topology: v5e:2x2
jax: 0.10.0
libtpu: 0.0.40
codegen_flags: <defaults>
</compile_context>

<pallas_src>
import jax
import jax.numpy as jnp
from jax.experimental import pallas as pl
from jax.experimental.pallas import tpu as pltpu

# ----------------------------- config (module __init__ defaults) --------------
RADIUS_FACTOR = 0.2
SIGMA_FACTOR = 0.2
KERNEL = 1
UNIT = 2
MAX_NUM_MOMENTS = 100

_LANE = 128          # lane width; output/clip axis is padded to a multiple of this
_MAX_TILE = 1024     # max clips per grid step (multiple of 128)


# ----------------------------- Pallas kernel ----------------------------------
def _boundary_heads_kernel(xT_ref, sal_ref, w1T_ref, b1_ref, w2T_ref, b2_ref,
                           out_ref):
    """Fused center/window/offset heads, transposed layout (clips on lanes).

    xT_ref : (D, TM)   clip features for this tile (matmul dtype, e.g. bf16)
    sal_ref: (1, TM)   saliency scores (f32); mask = saliency >= 0
    w1T_ref: (3H, D)   packed first-layer weights (all three heads)
    b1_ref : (3H, 1)   packed first-layer biases (f32)
    w2T_ref: (3, 3H)   block-diagonal second-layer weights
    b2_ref : (3, 1)    second-layer biases (f32)
    out_ref: (3, TM)   row 0 = sigmoid(center)*mask, row 1 = window, row 2 = offset
    """
    # Layer 1: one MXU pass for all three heads.
    h = jnp.dot(w1T_ref[...], xT_ref[...],
                preferred_element_type=jnp.float32)          # (3H, TM) f32
    h = jnp.maximum(h + b1_ref[...], 0.0)                    # bias + ReLU (f32, VPU)

    # Layer 2: block-diagonal matmul collapses the three scalar heads.
    o = jnp.dot(w2T_ref[...], h.astype(w2T_ref.dtype),
                preferred_element_type=jnp.float32)          # (3, TM) f32
    o = o + b2_ref[...]

    # Saliency mask computed in-kernel; sigmoid+mask applied to the center row only.
    mask = (sal_ref[...] >= 0.0).astype(jnp.float32)         # (1, TM)
    row = jax.lax.broadcasted_iota(jnp.int32, o.shape, 0)    # head index per sublane
    out_ref[...] = jnp.where(row == 0, jax.nn.sigmoid(o) * mask, o)


def _pick_tile(n_pad):
    """Largest multiple of 128 that divides n_pad and is <= _MAX_TILE."""
    best = _LANE
    t = _LANE
    while t <= min(n_pad, _MAX_TILE):
        if n_pad % t == 0:
            best = t
        t += _LANE
    return best


def _run_heads(x_t, sal_row, packed, *, tile):
    """x_t: (D, N) matmul-dtype, sal_row: (1, N) f32 -> (3, N) f32 predictions."""
    d, n = x_t.shape
    h3 = packed["w1T"].shape[0]

    return pl.pallas_call(
        _boundary_heads_kernel,
        grid=(n // tile,),
        in_specs=[
            pl.BlockSpec((d, tile), lambda i: (0, i)),   # activations (tiled on lanes)
            pl.BlockSpec((1, tile), lambda i: (0, i)),   # saliency row
            pl.BlockSpec((h3, d), lambda i: (0, 0)),     # packed W1^T (resident)
            pl.BlockSpec((h3, 1), lambda i: (0, 0)),     # packed b1
            pl.BlockSpec((3, h3), lambda i: (0, 0)),     # block-diag W2^T
            pl.BlockSpec((3, 1), lambda i: (0, 0)),      # packed b2
        ],
        out_specs=pl.BlockSpec((3, tile), lambda i: (0, i)),
        out_shape=jax.ShapeDtypeStruct((3, n), jnp.float32),
        compiler_params=pltpu.CompilerParams(
            dimension_semantics=("parallel",)),          # shards tiles across TCs on v7x
    )(x_t, sal_row, packed["w1T"], packed["b1"], packed["w2T"], packed["b2"])


# ----------------------------- JAX glue: get_boundary --------------------------
def _get_boundary(center_pred, window_pred, offset_pred):
    b, t = center_pred.shape
    if KERNEL > 1:  # kernel == 1 -> max_pool1d is identity, skip the NMS entirely
        pad = (KERNEL - 1) // 2
        hmax = jax.lax.reduce_window(
            center_pred, -jnp.inf, jax.lax.max,
            window_dimensions=(1, KERNEL), window_strides=(1, 1),
            padding=[(0, 0), (pad, pad)])
        center_pred = center_pred * (hmax == center_pred).astype(center_pred.dtype)

    topk = min(MAX_NUM_MOMENTS, t)
    scores, inds = jax.lax.top_k(center_pred, topk)

    off = jnp.clip(jnp.take_along_axis(offset_pred, inds, axis=1), 0.0, None)
    win = jnp.clip(jnp.take_along_axis(window_pred, inds, axis=1), 0.0, None)
    center = inds.astype(jnp.float32) + off

    lo = center - win / 2.0
    hi = center + win / 2.0
    bounds = jnp.stack([lo, hi], axis=-1)
    bounds = jnp.clip(bounds, 0.0, float(t - 1)) * UNIT
    bounds = bounds.at[:, :, 1].add(UNIT)
    return jnp.concatenate([bounds, scores[..., None]], axis=2)


# ----------------------------- forward (test mode) ----------------------------
@jax.jit
def boundary_head_forward(x, saliency, packed):
    """x: [B, T, D] float32, saliency: [B, T] float32 -> boundary [B, topk, 3]."""
    bsz, t, d = x.shape
    n = bsz * t
    matmul_dtype = packed["w1T"].dtype

    # Lay clips out on the lane axis (D, N); layout plumbing for lane-dense output.
    x_t = x.reshape(n, d).astype(matmul_dtype).T            # (D, N)
    sal = saliency.reshape(1, n).astype(jnp.float32)        # (1, N)

    # Pad the clip axis to a multiple of 128 so output stores are unmasked
    # lane-dense `vst`s; padded clips get saliency = -1 (masked out).
    n_pad = pl.cdiv(n, _LANE) * _LANE
    if n_pad > _MAX_TILE:
        n_pad = pl.cdiv(n_pad, _MAX_TILE) * _MAX_TILE
    if n_pad != n:
        x_t = jnp.pad(x_t, ((0, 0), (0, n_pad - n)))
        sal = jnp.pad(sal, ((0, 0), (0, n_pad - n)), constant_values=-1.0)
    tile = _pick_tile(n_pad)

    preds = _run_heads(x_t, sal, packed, tile=tile)[:, :n]  # (3, N)
    center = preds[0].reshape(bsz, t)
    window = preds[1].reshape(bsz, t)
    offset = preds[2].reshape(bsz, t)
    return _get_boundary(center, window, offset)


# ----------------------------- parameter init / packing -----------------------
def init_params(key, d, h):
    """Deterministic synthetic weights for the three 2-layer heads (dims=[d, h, 1])."""
    keys = jax.random.split(key, 12)
    norm = lambda k, shp, scale: scale * jax.random.normal(k, shp, jnp.float32)
    p = {}
    for i, name in enumerate(("c", "w", "o")):
        p[f"w{name}1"] = norm(keys[4 * i + 0], (d, h), 0.05)
        p[f"b{name}1"] = norm(keys[4 * i + 1], (1, h), 0.05)
        p[f"w{name}2"] = norm(keys[4 * i + 2], (h, 1), 0.05)
        p[f"b{name}2"] = norm(keys[4 * i + 3], (1, 1), 0.05)
    return p


def pack_params(params, matmul_dtype=jnp.bfloat16):
    """Pack the three heads into the fused-kernel layout (done once, offline)."""
    h = params["wc2"].shape[0]
    # First layer: concat along the output dim -> (D, 3H), store transposed.
    w1 = jnp.concatenate([params["wc1"], params["ww1"], params["wo1"]], axis=1)
    b1 = jnp.concatenate([params["bc1"], params["bw1"], params["bo1"]], axis=1)
    # Second layer: block-diagonal (3, 3H) so one matmul yields all three scalars.
    w2 = jnp.zeros((3, 3 * h), jnp.float32)
    w2 = w2.at[0, 0:h].set(params["wc2"][:, 0])
    w2 = w2.at[1, h:2 * h].set(params["ww2"][:, 0])
    w2 = w2.at[2, 2 * h:3 * h].set(params["wo2"][:, 0])
    b2 = jnp.stack([params["bc2"][0, 0], params["bw2"][0, 0],
                    params["bo2"][0, 0]]).reshape(3, 1)
    return {
        "w1T": w1.T.astype(matmul_dtype),            # (3H, D)
        "b1": b1.T.astype(jnp.float32),              # (3H, 1)
        "w2T": w2.astype(matmul_dtype),              # (3, 3H)
        "b2": b2.astype(jnp.float32),                # (3, 1)
    }


# ----------------------------- main --------------------------------------------
if __name__ == "__main__":
    B, T, D, H = 2, 8, 32, 32  # batch, num_clips (seq), hidden dim, head hidden dim

    key = jax.random.PRNGKey(0)
    k_x, k_s, k_p = jax.random.split(key, 3)

    x = jax.random.normal(k_x, (B, T, D), jnp.float32)
    # saliency scores; negative entries are masked out (as in the module).
    saliency = jax.random.uniform(k_s, (B, T), jnp.float32, minval=-0.5, maxval=1.0)
    packed = pack_params(init_params(k_p, D, H))

    boundary = boundary_head_forward(x, saliency, packed)
    boundary = jax.block_until_ready(boundary)

    assert boundary.shape == (B, min(MAX_NUM_MOMENTS, T), 3)
    assert bool(jnp.all(jnp.isfinite(boundary)))
    print("KERNEL_OK")
</pallas_src>

<mosaic_0001>
module attributes {stable_mosaic.version = 11 : i64} {
  func.func @_boundary_heads_kernel(%arg0: i32, %arg1: memref<32x128xbf16, #tpu.memory_space<vmem>>, %arg2: memref<1x128xf32, #tpu.memory_space<vmem>>, %arg3: memref<96x32xbf16, #tpu.memory_space<vmem>>, %arg4: memref<96x1xf32, #tpu.memory_space<vmem>>, %arg5: memref<3x96xbf16, #tpu.memory_space<vmem>>, %arg6: memref<3x1xf32, #tpu.memory_space<vmem>>, %arg7: memref<3x128xf32, #tpu.memory_space<vmem>>) attributes {dimension_semantics = [#tpu.dimension_semantics<parallel>], iteration_bounds = array<i64: 1>, scalar_prefetch = 0 : i64, scratch_operands = 0 : i64, tpu.core_type = #tpu.core_type<tc>, window_params = [{transform_indices = @transform_0, window_bounds = array<i64: 32, 128>}, {transform_indices = @transform_1, window_bounds = array<i64: 1, 128>}, {pipeline_mode = #tpu.pipeline_mode<synchronous>, transform_indices = @transform_2, window_bounds = array<i64: 96, 32>}, {pipeline_mode = #tpu.pipeline_mode<synchronous>, transform_indices = @transform_3, window_bounds = array<i64: 96, 1>}, {pipeline_mode = #tpu.pipeline_mode<synchronous>, transform_indices = @transform_4, window_bounds = array<i64: 3, 96>}, {pipeline_mode = #tpu.pipeline_mode<synchronous>, transform_indices = @transform_5, window_bounds = array<i64: 3, 1>}, {transform_indices = @transform_6, window_bounds = array<i64: 3, 128>}]} {
    %c0 = arith.constant 0 : index
    %c0_0 = arith.constant 0 : index
    %0 = vector.load %arg3[%c0, %c0_0] : memref<96x32xbf16, #tpu.memory_space<vmem>>, vector<96x32xbf16>
    %c0_1 = arith.constant 0 : index
    %c0_2 = arith.constant 0 : index
    %1 = vector.load %arg1[%c0_1, %c0_2] : memref<32x128xbf16, #tpu.memory_space<vmem>>, vector<32x128xbf16>
    %cst = arith.constant dense<0.000000e+00> : vector<96x128xf32>
    %2 = tpu.matmul %0, %1, %cst {dimension_numbers = #tpu.dot_dimension_numbers<[1], [0], [0], [1], [0, 0, 1, 1], [], []>} : vector<96x32xbf16>, vector<32x128xbf16>, vector<96x128xf32> -> vector<96x128xf32>
    %c0_3 = arith.constant 0 : index
    %c0_4 = arith.constant 0 : index
    %3 = vector.load %arg4[%c0_3, %c0_4] : memref<96x1xf32, #tpu.memory_space<vmem>>, vector<96x1xf32>
    %4 = vector.broadcast %3 : vector<96x1xf32> to vector<96x128xf32>
    %5 = arith.addf %2, %4 : vector<96x128xf32>
    %cst_5 = arith.constant 0.000000e+00 : f32
    %6 = vector.broadcast %cst_5 : f32 to vector<96x128xf32>
    %7 = arith.maximumf %5, %6 : vector<96x128xf32>
    %c0_6 = arith.constant 0 : index
    %c0_7 = arith.constant 0 : index
    %8 = vector.load %arg5[%c0_6, %c0_7] : memref<3x96xbf16, #tpu.memory_space<vmem>>, vector<3x96xbf16>
    %9 = arith.truncf %7 : vector<96x128xf32> to vector<96x128xbf16>
    %cst_8 = arith.constant dense<0.000000e+00> : vector<3x128xf32>
    %10 = tpu.matmul %8, %9, %cst_8 {dimension_numbers = #tpu.dot_dimension_numbers<[1], [0], [0], [1], [0, 0, 1, 1], [], []>} : vector<3x96xbf16>, vector<96x128xbf16>, vector<3x128xf32> -> vector<3x128xf32>
    %c0_9 = arith.constant 0 : index
    %c0_10 = arith.constant 0 : index
    %11 = vector.load %arg6[%c0_9, %c0_10] : memref<3x1xf32, #tpu.memory_space<vmem>>, vector<3x1xf32>
    %12 = vector.broadcast %11 : vector<3x1xf32> to vector<3x128xf32>
    %13 = arith.addf %10, %12 : vector<3x128xf32>
    %c0_11 = arith.constant 0 : index
    %c0_12 = arith.constant 0 : index
    %14 = vector.load %arg2[%c0_11, %c0_12] : memref<1x128xf32, #tpu.memory_space<vmem>>, vector<1x128xf32>
    %cst_13 = arith.constant 0.000000e+00 : f32
    %15 = vector.broadcast %cst_13 : f32 to vector<1x128xf32>
    %16 = arith.cmpf oge, %14, %15 : vector<1x128xf32>
    %17 = arith.extui %16 : vector<1x128xi1> to vector<1x128xi32>
    %18 = arith.sitofp %17 : vector<1x128xi32> to vector<1x128xf32>
    %19 = tpu.iota {dimensions = array<i32: 0>} : vector<3x128xi32>
    %c0_i32 = arith.constant 0 : i32
    %20 = vector.broadcast %c0_i32 : i32 to vector<3x128xi32>
    %21 = arith.cmpi eq, %19, %20 : vector<3x128xi32>
    %22 = arith.negf %13 : vector<3x128xf32>
    %23 = math.exp %22 : vector<3x128xf32>
    %cst_14 = arith.constant 1.000000e+00 : f32
    %24 = vector.broadcast %cst_14 : f32 to vector<3x128xf32>
    %25 = arith.addf %24, %23 : vector<3x128xf32>
    %26 = arith.divf %24, %25 : vector<3x128xf32>
    %27 = vector.broadcast %18 : vector<1x128xf32> to vector<3x128xf32>
    %28 = arith.mulf %26, %27 : vector<3x128xf32>
    %29 = arith.select %21, %28, %13 : vector<3x128xi1>, vector<3x128xf32>
    %c0_15 = arith.constant 0 : index
    %c0_16 = arith.constant 0 : index
    %30 = vector.load %arg7[%c0_15, %c0_16] : memref<3x128xf32, #tpu.memory_space<vmem>>, vector<3x128xf32>
    tpu.vector_store %arg7[%c0_15, %c0_16], %29 {strides = array<i32>} : memref<3x128xf32, #tpu.memory_space<vmem>>, vector<3x128xf32>,
    return
  }
  func.func @transform_0(%arg0: i32) -> (i32, i32) {
    %c0_i32 = arith.constant 0 : i32
    %c0_i32_0 = arith.constant 0 : i32
    return %c0_i32, %arg0 : i32, i32
  }
  func.func @transform_1(%arg0: i32) -> (i32, i32) {
    %c0_i32 = arith.constant 0 : i32
    %c0_i32_0 = arith.constant 0 : i32
    return %c0_i32, %arg0 : i32, i32
  }
  func.func @transform_2(%arg0: i32) -> (i32, i32) {
    %c0_i32 = arith.constant 0 : i32
    %c0_i32_0 = arith.constant 0 : i32
    %c0_i32_1 = arith.constant 0 : i32
    return %c0_i32, %c0_i32_0 : i32, i32
  }
  func.func @transform_3(%arg0: i32) -> (i32, i32) {
    %c0_i32 = arith.constant 0 : i32
    %c0_i32_0 = arith.constant 0 : i32
    %c0_i32_1 = arith.constant 0 : i32
    return %c0_i32, %c0_i32_0 : i32, i32
  }
  func.func @transform_4(%arg0: i32) -> (i32, i32) {
    %c0_i32 = arith.constant 0 : i32
    %c0_i32_0 = arith.constant 0 : i32
    %c0_i32_1 = arith.constant 0 : i32
    return %c0_i32, %c0_i32_0 : i32, i32
  }
  func.func @transform_5(%arg0: i32) -> (i32, i32) {
    %c0_i32 = arith.constant 0 : i32
    %c0_i32_0 = arith.constant 0 : i32
    %c0_i32_1 = arith.constant 0 : i32
    return %c0_i32, %c0_i32_0 : i32, i32
  }
  func.func @transform_6(%arg0: i32) -> (i32, i32) {
    %c0_i32 = arith.constant 0 : i32
    %c0_i32_0 = arith.constant 0 : i32
    return %c0_i32, %arg0 : i32, i32
  }
}

</mosaic_0001>

<llo_original>
// kernel: squeeze.3
$region0: #{squeeze.3}
  %s0 = inlined_call_operand.vmem [shape: f32[16], index: 0, kind: input, shape index: {}]
  %s1 = inlined_call_operand.vmem [shape: f32[2,8], index: 1, kind: output, shape index: {}]
  $region1: #{squeeze.3} parent=0
    #allocation0 [shape = 'u8[4096]{0}', space=vmem, size = 0x1000, scoped, tag = 'scoped mem for output reshape']
    #allocation1 [shape = 'u8[4096]{0}', space=vmem, size = 0x1000, scoped, tag = 'scoped mem for input reshape']
    %s3 = ssub.s32 2, 1
    %v4 = vld [vmem:[%s0] sm:%s3]
    %5 = vst [vmem:[#allocation1] sm:%s3] %v4
    %v6 = vld [vmem:[#allocation1] sm:$0x1]
    %vm7 = vcmask 64512
    %8 = vst.msk [vmem:[#allocation0] sm:$0x1] %vm7, %v6
    %v9 = vld [vmem:[#allocation1] sm:$0x1]
    %10 = vrot.lane.b32.xlu0 %v9, 120
    %v11 = vpop.permute.xlu0 %10
    %vm12 = vcmask 64512
    %s13 = scalar_lea.vmem [#allocation0], 1
    %14 = vst.msk [vmem:[%s13] sm:$0x1] %vm12, %v11
    %s16 = ssub.s32 4, 1
    %v17 = vld [vmem:[#allocation0] sm:%s16]
    %s19 = ssub.s32 4, 1
    %20 = vst [vmem:[%s1] sm:%s19] %v17

// kernel: boundary_head_forward.1
$region0: #{boundary_head_forward.1}
  #allocation0 [shape = 'u32[]', space=smem, size = 0x4, offset = 0x4, fixed_abs, tag = 'smem constant byte address 0x4 - core index']
  #allocation1 [shape = 'u32[72,128]{1,0:T(1,128)}', space=vmem, size = 0x9000, scoped, tag = 'internal scratch']
  %s0 = inlined_call_operand.vmem [shape: bf16[32,128], index: 0, kind: input, shape index: {}]
  %s1 = inlined_call_operand.vmem [shape: f32[1,128], index: 1, kind: input, shape index: {}]
  %s2 = inlined_call_operand.vmem [shape: bf16[96,32], index: 2, kind: input, shape index: {}]
  %s3 = inlined_call_operand.vmem [shape: f32[96,1], index: 3, kind: input, shape index: {}]
  %s4 = inlined_call_operand.vmem [shape: bf16[3,96], index: 4, kind: input, shape index: {}]
  %s5 = inlined_call_operand.vmem [shape: f32[3,1], index: 5, kind: input, shape index: {}]
  %s6 = inlined_call_operand.vmem [shape: f32[3,128], index: 6, kind: output, shape index: {}]
  %s7 = sld [smem:[#allocation0]]
  $region34: #{boundary_head_forward.1} parent=0
    _
  %s9 = ssub.s32 1, %s7
  %s10 = scalar_select 0, %s9, %s7
  // Predicated region
  $region2: #{boundary_head_forward.1} parent=0 // pred_check
    _
  $region3: #{boundary_head_forward.1} parent=0 // pred_check_branch
    %12 = sbr.rel (0) target = $region5
  $region4: #{boundary_head_forward.1} parent=0 // pred_region
    _
  $region5: #{boundary_head_forward.1} parent=0 // pred_fallthru
    _
  // Predicated region
  $region6: #{boundary_head_forward.1} parent=0 // pred_check
    _
  $region7: #{boundary_head_forward.1} parent=0 // pred_check_branch
    %14 = sbr.rel (0) target = $region9
  $region8: #{boundary_head_forward.1} parent=0 // pred_region
    _
  $region9: #{boundary_head_forward.1} parent=0 // pred_fallthru
    _
  // Predicated region
  $region10: #{boundary_head_forward.1} parent=0 // pred_check
    _
  $region11: #{boundary_head_forward.1} parent=0 // pred_check_branch
    %16 = sbr.rel (0) target = $region13
  $region12: #{boundary_head_forward.1} parent=0 // pred_region
    _
  $region13: #{boundary_head_forward.1} parent=0 // pred_fallthru
    _
  // Predicated region
  $region14: #{boundary_head_forward.1} parent=0 // pred_check
    _
  $region15: #{boundary_head_forward.1} parent=0 // pred_check_branch
    %18 = sbr.rel (0) target = $region17
  $region16: #{boundary_head_forward.1} parent=0 // pred_region
    _
  $region17: #{boundary_head_forward.1} parent=0 // pred_fallthru
    _
  // Predicated region
  $region18: #{boundary_head_forward.1} parent=0 // pred_check
    _
  $region19: #{boundary_head_forward.1} parent=0 // pred_check_branch
    %20 = sbr.rel (0) target = $region21
  $region20: #{boundary_head_forward.1} parent=0 // pred_region
    _
  $region21: #{boundary_head_forward.1} parent=0 // pred_fallthru
    _
  // Predicated region
  $region22: #{boundary_head_forward.1} parent=0 // pred_check
    _
  $region23: #{boundary_head_forward.1} parent=0 // pred_check_branch
    %22 = sbr.rel (0) target = $region25
  $region24: #{boundary_head_forward.1} parent=0 // pred_region
    _
  $region25: #{boundary_head_forward.1} parent=0 // pred_fallthru
    _
  %v24 = vld [vmem:[%s2] sm:$0xf]
  %v25 = vld [vmem:[%s2 + $0x4] sm:$0xf]
  %v26 = vld [vmem:[%s2 + $0x8] sm:$0xf]
  %v27 = vld [vmem:[%s2 + $0xc] sm:$0xf]
  %v28 = vld [vmem:[%s2 + $0x10] sm:$0xf]
  %v29 = vld [vmem:[%s2 + $0x14] sm:$0xf]
  %v30 = vld [vmem:[%s2 + $0x18] sm:$0xf]
  %v31 = vld [vmem:[%s2 + $0x1c] sm:$0xf]
  %v32 = vld [vmem:[%s2 + $0x20] sm:$0xf]
  %v33 = vld [vmem:[%s2 + $0x24] sm:$0xf]
  %v34 = vld [vmem:[%s2 + $0x28] sm:$0xf]
  %v35 = vld [vmem:[%s2 + $0x2c] sm:$0xf]
  %v36 = vld [vmem:[%s0] sm:$0xf]
  %v37 = vld [vmem:[%s0 + $0x4] sm:$0xf]
  %v38 = vld [vmem:[%s0 + $0x8] sm:$0xf]
  %v39 = vld [vmem:[%s0 + $0xc] sm:$0xf]
  %v40 = vld [vmem:[%s3] sm:$0xff]
  %v41 = vld [vmem:[%s3 + $0x8] sm:$0xff]
  %v42 = vld [vmem:[%s3 + $0x10] sm:$0xff]
  %v43 = vld [vmem:[%s3 + $0x18] sm:$0xff]
  %v44 = vld [vmem:[%s3 + $0x20] sm:$0xff]
  %v45 = vld [vmem:[%s3 + $0x28] sm:$0xff]
  %v46 = vld [vmem:[%s3 + $0x30] sm:$0xff]
  %v47 = vld [vmem:[%s3 + $0x38] sm:$0xff]
  %v48 = vld [vmem:[%s3 + $0x40] sm:$0xff]
  %v49 = vld [vmem:[%s3 + $0x48] sm:$0xff]
  %v50 = vld [vmem:[%s3 + $0x50] sm:$0xff]
  %v51 = vld [vmem:[%s3 + $0x58] sm:$0xff]
  %53 = vset.pattern.permute.xlu0 0
  %54 = vperm.xlu0 %53, %v40
  %v55 = vpop.permute.xlu0 %54
  %58 = vset.pattern.permute.xlu0 0
  %59 = vperm.xlu0 %58, %v41
  %v60 = vpop.permute.xlu0 %59
  %63 = vset.pattern.permute.xlu0 0
  %64 = vperm.xlu0 %63, %v42
  %v65 = vpop.permute.xlu0 %64
  %68 = vset.pattern.permute.xlu0 0
  %69 = vperm.xlu0 %68, %v43
  %v70 = vpop.permute.xlu0 %69
  %73 = vset.pattern.permute.xlu0 0
  %74 = vperm.xlu0 %73, %v44
  %v75 = vpop.permute.xlu0 %74
  %78 = vset.pattern.permute.xlu0 0
  %79 = vperm.xlu0 %78, %v45
  %v80 = vpop.permute.xlu0 %79
  %83 = vset.pattern.permute.xlu0 0
  %84 = vperm.xlu0 %83, %v46
  %v85 = vpop.permute.xlu0 %84
  %88 = vset.pattern.permute.xlu0 0
  %89 = vperm.xlu0 %88, %v47
  %v90 = vpop.permute.xlu0 %89
  %93 = vset.pattern.permute.xlu0 0
  %94 = vperm.xlu0 %93, %v48
  %v95 = vpop.permute.xlu0 %94
  %98 = vset.pattern.permute.xlu0 0
  %99 = vperm.xlu0 %98, %v49
  %v100 = vpop.permute.xlu0 %99
  %103 = vset.pattern.permute.xlu0 0
  %104 = vperm.xlu0 %103, %v50
  %v105 = vpop.permute.xlu0 %104
  %108 = vset.pattern.permute.xlu0 0
  %109 = vperm.xlu0 %108, %v51
  %v110 = vpop.permute.xlu0 %109
  %v124 = vunpack.c.l.b16 %v24
  %v125 = vunpack.c.l.b16 %v25
  %v126 = vunpack.c.l.b16 %v26
  %v127 = vunpack.c.l.b16 %v27
  %v128 = vunpack.c.l.b16 %v28
  %v129 = vunpack.c.l.b16 %v29
  %v130 = vunpack.c.l.b16 %v30
  %v131 = vunpack.c.l.b16 %v31
  %v132 = vunpack.c.l.b16 %v32
  %v133 = vunpack.c.l.b16 %v33
  %v134 = vunpack.c.l.b16 %v34
  %v135 = vunpack.c.l.b16 %v35
  %v136 = vpack.c.b16 %v125, %v124
  %v137 = vpack.c.b16 %v127, %v126
  %v138 = vpack.c.b16 %v129, %v128
  %v139 = vpack.c.b16 %v131, %v130
  %v140 = vpack.c.b16 %v133, %v132
  %v141 = vpack.c.b16 %v135, %v134
  %v146 = vunpack.c.l.b16 %v36
  %v147 = vunpack.c.l.b16 %v37
  %v148 = vunpack.c.l.b16 %v38
  %v149 = vunpack.c.l.b16 %v39
  %v150 = vpack.c.b16 %v147, %v146
  %v151 = vpack.c.b16 %v149, %v148
  %vm154 = vcmask 261120
  %v156 = vsel %vm154, %v136, 0
  %v159 = vsel %vm154, %v137, 0
  %v162 = vsel %vm154, %v138, 0
  %v165 = vsel %vm154, %v139, 0
  %v168 = vsel %vm154, %v140, 0
  %v171 = vsel %vm154, %v141, 0
  %173 = vmatpush.bf16.msra.mxu0 0
  %174 = vmatpush.bf16.msra.mxu0 0
  %175 = vmatpush.bf16.msra.mxu0 0
  %176 = vmatpush.bf16.msra.mxu0 0
  %177 = vmatpush.bf16.msra.mxu0 0
  %178 = vmatpush.bf16.msra.mxu0 0
  %179 = vmatpush.bf16.msra.mxu0 %v151
  %180 = vmatpush.bf16.msra.mxu0 %v150
  %181 = vmatmul.bf16.gmra.mxu0 %v156
  %v182 = vpop.f32.mrf.mxu0
  %v183 = vadd.f32 %v55, %v182
  %v184 = vpop.f32.mrf.mxu0
  %v185 = vadd.f32 %v60, %v184
  %186 = vmatmul.bf16.gmra.mxu0 %v159
  %v187 = vpop.f32.mrf.mxu0
  %v188 = vadd.f32 %v65, %v187
  %v189 = vpop.f32.mrf.mxu0
  %v190 = vadd.f32 %v70, %v189
  %191 = vmatmul.bf16.gmra.mxu0 %v162
  %v192 = vpop.f32.mrf.mxu0
  %v193 = vadd.f32 %v75, %v192
  %v194 = vpop.f32.mrf.mxu0
  %v195 = vadd.f32 %v80, %v194
  %196 = vmatmul.bf16.gmra.mxu0 %v165
  %v197 = vpop.f32.mrf.mxu0
  %v198 = vadd.f32 %v85, %v197
  %v199 = vpop.f32.mrf.mxu0
  %v200 = vadd.f32 %v90, %v199
  %201 = vmatmul.bf16.gmra.mxu0 %v168
  %v202 = vpop.f32.mrf.mxu0
  %v203 = vadd.f32 %v95, %v202
  %v204 = vpop.f32.mrf.mxu0
  %v205 = vadd.f32 %v100, %v204
  %206 = vmatmul.bf16.gmra.mxu0 %v171
  %v207 = vpop.f32.mrf.mxu0
  %v208 = vadd.f32 %v105, %v207
  %v209 = vpop.f32.mrf.mxu0
  %v210 = vadd.f32 %v110, %v209
  %211 = vdwg.mxu0
  %v212 = vmax.f32 %v183, 0.0
  %v213 = vmax.f32 %v185, 0.0
  %v214 = vmax.f32 %v188, 0.0
  %v215 = vmax.f32 %v190, 0.0
  %v216 = vmax.f32 %v193, 0.0
  %v217 = vmax.f32 %v195, 0.0
  %v218 = vmax.f32 %v198, 0.0
  %v219 = vmax.f32 %v200, 0.0
  %v220 = vmax.f32 %v203, 0.0
  %v221 = vmax.f32 %v205, 0.0
  %v222 = vmax.f32 %v208, 0.0
  %v223 = vmax.f32 %v210, 0.0
  %v224 = vld [vmem:[%s4] sm:$0x3]
  %v225 = vpack.c.bf16 %v213, %v212
  %v226 = vpack.c.bf16 %v215, %v214
  %v227 = vpack.c.bf16 %v217, %v216
  %v228 = vpack.c.bf16 %v219, %v218
  %v229 = vpack.c.bf16 %v221, %v220
  %v230 = vpack.c.bf16 %v223, %v222
  %v231 = vld [vmem:[%s5] sm:$0x7]
  %233 = vset.pattern.permute.xlu0 0
  %234 = vperm.xlu0 %233, %v231
  %v235 = vpop.permute.xlu0 %234
  %vm237 = vcmask 785408
  %v239 = vsel %vm237, %v224, 0
  %241 = vmatpush.bf16.msra.mxu0 0
  %242 = vmatpush.bf16.msra.mxu0 0
  %243 = vmatpush.bf16.msra.mxu0 %v230
  %244 = vmatpush.bf16.msra.mxu0 %v229
  %245 = vmatpush.bf16.msra.mxu0 %v228
  %246 = vmatpush.bf16.msra.mxu0 %v227
  %247 = vmatpush.bf16.msra.mxu0 %v226
  %248 = vmatpush.bf16.msra.mxu0 %v225
  %249 = vmatmul.bf16.gmra.mxu0 %v239
  %v250 = vpop.f32.mrf.mxu0
  %v251 = vadd.f32 %v235, %v250
  %v252 = vpop.f32.mrf.mxu0
  %253 = vdwg.mxu0
  %v254 = vld [vmem:[%s1] sm:$0x1]
  %vm255 = vcmp.ge.f32.partialorder %v254, 0.0
  %v256 = vsel %vm255, 1, 0
  %v257 = vcvt.s32.f32 %v256
  %v258 = vlaneseq
  %v259 = vshrl.u32 %v258, 7
  %vm260 = vcmp.eq.s32.totalorder %v259, 0
  %v261 = vxor.u32 %v251, 2147483648
  %v262 = vmul.f32 %v261, 1.442695
  %v263 = vpow.pop %v262
  %v264 = vadd.f32 %v263, 1.0
  %v265 = vrcp.pop %v264
  %v266 = vmul.f32 %v264, %v265
  %v267 = vsub.f32 1.0, %v266
  %v268 = vmul.f32 %v265, %v267
  %v269 = vadd.f32 %v265, %v268
  %vm270 = vweird.f32 %v264
  %vm271 = vweird.f32 %v265
  %vm272 = vmor %vm270, %vm271
  %v273 = vsel %vm272, %v265, %v269
  %v274 = vand.u32 2147483647, %v264
  %vm275 = vcmp.eq.f32.partialorder %v274, 8.507059e+37
  %v276 = vand.u32 %v264, 2147483648
  %v277 = vor.u32 1.1754944e-38, %v276
  %v278 = vsel %vm275, %v277, %v273
  %v279 = vmul.f32 1.0, %v278
  %v281 = vperm.slane %v257, 0
  %v283 = vmul.f32 %v279, %v281
  %v284 = vsel %vm260, %v283, %v251
  %285 = vst [vmem:[%s6] sm:$0x7] %v284
  // Predicated region
  $region26: #{boundary_head_forward.1} parent=0 // pred_check
    _
  $region27: #{boundary_head_forward.1} parent=0 // pred_check_branch
    %287 = sbr.rel (0) target = $region29
  $region28: #{boundary_head_forward.1} parent=0 // pred_region
    _
  $region29: #{boundary_head_forward.1} parent=0 // pred_fallthru
    _
  // Predicated region
  $region30: #{boundary_head_forward.1} parent=0 // pred_check
    _
  $region31: #{boundary_head_forward.1} parent=0 // pred_check_branch
    %289 = sbr.rel (0) target = $region33
  $region32: #{boundary_head_forward.1} parent=0 // pred_region
    _
  $region33: #{boundary_head_forward.1} parent=0 // pred_fallthru
    _

</llo_original>
